<compile_context>
chip_gen: v5e
topology: v5e:2x2
jax: 0.10.0
libtpu: 0.0.40
codegen_flags: <defaults>
</compile_context>

<pallas_src>
import jax
import jax.numpy as jnp
from jax.experimental import pallas as pl
from jax.experimental.pallas import tpu as pltpu


_LANES = 128
_SUBLANES = 8
_MAX_BLOCK_ROWS = 8192          # 8192 * 128 * 4B = 4 MiB per block per buffer
_MIN_GRID_STEPS = 4             # >= 2 pipelined steps per TC on v7x's 2 cores
_XLA_THRESHOLD = 1 << 20        # below ~1M elements, plain XLA wins on overhead


def _inverse_length_kernel(len_ref, out_ref):
    # Cast inside the kernel (no separate full-HBM-pass XLA cast), then exact
    # reciprocal on the VPU. The kernel is HBM-bound; compute is free filler.
    x = len_ref[...].astype(jnp.float32)
    out_ref[...] = pl.reciprocal(x, approx=False)


def _round_up(x: int, m: int) -> int:
    return ((x + m - 1) // m) * m


def _pick_block_rows(rows: int) -> int:
    # Cap at 4 MiB per block (16 MiB double-buffered in+out, under the 32 MiB
    # scoped-VMEM limit we request), but keep the grid at >= _MIN_GRID_STEPS
    # so DMA-in / compute / DMA-out overlap and v7x's two TensorCores both
    # get work.
    target = _round_up(pl.cdiv(rows, _MIN_GRID_STEPS), _SUBLANES)
    return max(_SUBLANES, min(_MAX_BLOCK_ROWS, target))


def inverse_length_padded(x2d: jax.Array) -> jax.Array:
    """Zero-copy kernel entry: `x2d` is the positive lengths already laid out
    lane-dense as (rows, 128) with rows a multiple of 8 (pad slots may hold
    any positive value). Returns float32 (rows, 128) with the elementwise
    reciprocal. Exactly one HBM read + one HBM write."""
    rows, lanes = x2d.shape
    assert lanes == _LANES, f"last dim must be {_LANES}, got {lanes}"
    assert rows % _SUBLANES == 0, f"rows must be a multiple of {_SUBLANES}"

    block_rows = _pick_block_rows(rows)
    grid = (pl.cdiv(rows, block_rows),)   # partial final block handled by Pallas

    return pl.pallas_call(
        _inverse_length_kernel,
        out_shape=jax.ShapeDtypeStruct((rows, _LANES), jnp.float32),
        grid=grid,
        in_specs=[pl.BlockSpec((block_rows, _LANES), lambda i: (i, 0))],
        out_specs=pl.BlockSpec((block_rows, _LANES), lambda i: (i, 0)),
        compiler_params=pltpu.CompilerParams(
            # 1 TC on v5e/v6e (serial loop either way); on v7x the two
            # TensorCores stream disjoint halves of the grid.
            dimension_semantics=("parallel",),
            # 16 MiB double-buffered footprint at the largest block; raise the
            # scoped limit so v5e's 16 MiB default is not the binding edge.
            vmem_limit_bytes=32 << 20,
        ),
    )(x2d)


def inverse_length(lengths: jax.Array, *, force_kernel: bool = False) -> jax.Array:
    """lengths: integer (or float) array of shape [N], all > 0.
    Returns float32 array [N] with 1/lengths[i].

    Small N (the usual Q-function case: a handful of actions per beam step)
    takes a fused XLA cast+reciprocal. The kernel path pads only to a multiple
    of 1024 elements and slices back; those two copies are extra HBM passes,
    so call this inside the consumer's jit (so XLA can fuse them with
    neighbors) or use `inverse_length_padded` directly for the zero-copy path.
    """
    n = lengths.shape[0]

    if n < _XLA_THRESHOLD and not force_kernel:
        return 1.0 / lengths.astype(jnp.float32)

    rows = _round_up(pl.cdiv(n, _LANES), _SUBLANES)   # only to 8*128 granularity
    n_pad = rows * _LANES
    if n_pad != n:
        # Pad with 1 so the reciprocal of the padding stays finite (discarded
        # by the final slice). Done in the input dtype; cast happens in-kernel.
        x = jnp.pad(lengths, (0, n_pad - n), constant_values=1)
    else:
        x = lengths

    out2d = inverse_length_padded(x.reshape(rows, _LANES))
    return out2d.reshape(-1)[:n]


if __name__ == "__main__":
    # TODO(synk): the beam-search rollout / Action & State object traversal in
    # QFunction (aggregate, rollout, recover_solutions) is host-side Python
    # control flow with no tensor equivalent; only the forward() numeric hot
    # path (1 / len(facts[-1])) is implemented here.
    key = jax.random.PRNGKey(0)

    # Case 1: typical tiny action batch (8 actions) — XLA fast path, plus the
    # forced Pallas path through the 1-D wrapper (pad -> kernel -> slice).
    num_actions = 8
    lengths_small = jax.random.randint(
        key, (num_actions,), minval=1, maxval=33, dtype=jnp.int32)

    q_xla = jax.block_until_ready(inverse_length(lengths_small))
    q_small = jax.block_until_ready(
        jax.jit(lambda x: inverse_length(x, force_kernel=True))(lengths_small))
    ref_small = 1.0 / lengths_small.astype(jnp.float32)
    assert q_xla.shape == (num_actions,) and q_xla.dtype == jnp.float32
    assert q_small.shape == (num_actions,) and q_small.dtype == jnp.float32
    assert jnp.allclose(q_xla, ref_small, rtol=1e-6, atol=1e-6)
    assert jnp.allclose(q_small, ref_small, rtol=1e-6, atol=1e-6)

    # Case 2: zero-copy path — lengths already lane-dense (rows, 128).
    key2 = jax.random.fold_in(key, 1)
    rows = 16
    lengths_2d = jax.random.randint(
        key2, (rows, _LANES), minval=1, maxval=257, dtype=jnp.int32)
    q_2d = jax.block_until_ready(inverse_length_padded(lengths_2d))
    ref_2d = 1.0 / lengths_2d.astype(jnp.float32)
    assert q_2d.shape == (rows, _LANES) and q_2d.dtype == jnp.float32
    assert jnp.allclose(q_2d, ref_2d, rtol=1e-6, atol=1e-6)

    # Case 3: ragged 1-D vector exercising pad + the partial final block:
    # 5000 elements -> 40 rows of 128 lanes; block_rows=16 -> grid=(3,) with
    # an 8-row partial last block.
    key3 = jax.random.fold_in(key, 2)
    n_big = 5000
    lengths_big = jax.random.randint(
        key3, (n_big,), minval=1, maxval=257, dtype=jnp.int32)
    q_big = jax.block_until_ready(
        jax.jit(lambda x: inverse_length(x, force_kernel=True))(lengths_big))
    ref_big = 1.0 / lengths_big.astype(jnp.float32)
    assert q_big.shape == (n_big,) and q_big.dtype == jnp.float32
    assert jnp.allclose(q_big, ref_big, rtol=1e-6, atol=1e-6)

    print("KERNEL_OK")
</pallas_src>

<mosaic_0001>
module attributes {stable_mosaic.version = 11 : i64} {
  func.func @_inverse_length_kernel(%arg0: i32, %arg1: memref<8x128xi32, #tpu.memory_space<vmem>>, %arg2: memref<8x128xf32, #tpu.memory_space<vmem>>) attributes {dimension_semantics = [#tpu.dimension_semantics<parallel>], iteration_bounds = array<i64: 1>, scalar_prefetch = 0 : i64, scratch_operands = 0 : i64, tpu.core_type = #tpu.core_type<tc>, window_params = [{transform_indices = @transform_0, window_bounds = array<i64: 8, 128>}, {transform_indices = @transform_1, window_bounds = array<i64: 8, 128>}]} {
    %c0 = arith.constant 0 : index
    %c0_0 = arith.constant 0 : index
    %0 = vector.load %arg1[%c0, %c0_0] : memref<8x128xi32, #tpu.memory_space<vmem>>, vector<8x128xi32>
    %1 = arith.sitofp %0 : vector<8x128xi32> to vector<8x128xf32>
    %2 = tpu.reciprocal %1 : vector<8x128xf32> -> vector<8x128xf32>
    %c0_1 = arith.constant 0 : index
    %c0_2 = arith.constant 0 : index
    %3 = vector.load %arg2[%c0_1, %c0_2] : memref<8x128xf32, #tpu.memory_space<vmem>>, vector<8x128xf32>
    tpu.vector_store %arg2[%c0_1, %c0_2], %2 {strides = array<i32>} : memref<8x128xf32, #tpu.memory_space<vmem>>, vector<8x128xf32>,
    return
  }
  func.func @transform_0(%arg0: i32) -> (i32, i32) {
    %c0_i32 = arith.constant 0 : i32
    %c0_i32_0 = arith.constant 0 : i32
    return %arg0, %c0_i32 : i32, i32
  }
  func.func @transform_1(%arg0: i32) -> (i32, i32) {
    %c0_i32 = arith.constant 0 : i32
    %c0_i32_0 = arith.constant 0 : i32
    return %arg0, %c0_i32 : i32, i32
  }
}

</mosaic_0001>

<llo_original>
// kernel: _lambda_.1
$region0: #{_lambda_.1}
  #allocation0 [shape = 'u32[]', space=smem, size = 0x4, offset = 0x4, fixed_abs, tag = 'smem constant byte address 0x4 - core index']
  #allocation1 [shape = 'u32[72,128]{1,0:T(1,128)}', space=vmem, size = 0x9000, scoped, tag = 'internal scratch']
  %s0 = inlined_call_operand.vmem [shape: s32[8,128], index: 0, kind: input, shape index: {}]
  %s1 = inlined_call_operand.vmem [shape: f32[8,128], index: 1, kind: output, shape index: {}]
  %s2 = sld [smem:[#allocation0]]
  $region14: #{_lambda_.1} parent=0
    _
  %s4 = ssub.s32 1, %s2
  %s5 = scalar_select 0, %s4, %s2
  // Predicated region
  $region2: #{_lambda_.1} parent=0 // pred_check
    _
  $region3: #{_lambda_.1} parent=0 // pred_check_branch
    %7 = sbr.rel (0) target = $region5
  $region4: #{_lambda_.1} parent=0 // pred_region
    _
  $region5: #{_lambda_.1} parent=0 // pred_fallthru
    _
  %v8 = vld [vmem:[%s0] sm:$0xff]
  %v9 = vcvt.s32.f32 %v8
  %v10 = vrcp.pop %v9
  %v11 = vmul.f32 %v9, %v10
  %v12 = vsub.f32 1.0, %v11
  %v13 = vmul.f32 %v10, %v12
  %v14 = vadd.f32 %v10, %v13
  %vm15 = vweird.f32 %v9
  %vm16 = vweird.f32 %v10
  %vm17 = vmor %vm15, %vm16
  %v18 = vsel %vm17, %v10, %v14
  %v19 = vand.u32 2147483647, %v9
  %vm20 = vcmp.eq.f32.partialorder %v19, 8.507059e+37
  %v21 = vand.u32 %v9, 2147483648
  %v22 = vor.u32 1.1754944e-38, %v21
  %v23 = vsel %vm20, %v22, %v18
  %24 = vst [vmem:[%s1] sm:$0xff] %v23
  // Predicated region
  $region6: #{_lambda_.1} parent=0 // pred_check
    _
  $region7: #{_lambda_.1} parent=0 // pred_check_branch
    %26 = sbr.rel (0) target = $region9
  $region8: #{_lambda_.1} parent=0 // pred_region
    _
  $region9: #{_lambda_.1} parent=0 // pred_fallthru
    _
  // Predicated region
  $region10: #{_lambda_.1} parent=0 // pred_check
    _
  $region11: #{_lambda_.1} parent=0 // pred_check_branch
    %28 = sbr.rel (0) target = $region13
  $region12: #{_lambda_.1} parent=0 // pred_region
    _
  $region13: #{_lambda_.1} parent=0 // pred_fallthru
    _

</llo_original>
